<compile_context>
chip_gen: v7x
topology: tpu7x:2x2x1
jax: 0.10.0
libtpu: 0.0.40
codegen_flags: <defaults>
</compile_context>

<pallas_src>
import jax
import jax.numpy as jnp
from jax.experimental import pallas as pl
from jax.experimental.pallas import tpu as pltpu


def _detector_head_kernel(feat_ref, w_ref, b_ref, out_ref):
    # feat_ref: [TB, HW, C]   features (f32 or bf16), channels on the lane axis
    # w_ref:    [C,  Np]      f32 head weight, transposed + pre-scaled by 1/(H*W)
    # b_ref:    [1,  Np]      f32 head bias (zero-padded)
    # out_ref:  [TB, Np]      f32 logits (padded lanes are zero)
    feat = feat_ref[...].astype(jnp.float32)          # upcast in-kernel; keep HBM read narrow
    pooled = jnp.sum(feat, axis=1)                    # [TB, C]; mean scale folded into w
    logits = jnp.dot(pooled, w_ref[...], preferred_element_type=jnp.float32)
    out_ref[...] = logits + b_ref[...]


def resnet_detector_forward(c5, head_weight, head_bias, *, data_format="NHWC", block_b=8):
    """Fused spatial-mean pooling + linear head.

    c5:           C5 feature map, [B, H, W, C] (preferred, no transpose) or [B, C, H, W].
    head_weight:  [num_classes, C] (PyTorch nn.Linear layout).
    head_bias:    [num_classes].
    returns:      logits [B, num_classes] (f32).
    """
    if data_format == "NCHW":
        # Convenience path only: this transpose reads/writes the whole feature map in
        # HBM before the kernel — avoid it in production by producing NHWC features.
        c5 = jnp.transpose(c5, (0, 2, 3, 1))
    elif data_format != "NHWC":
        raise ValueError(f"unknown data_format {data_format}")

    B, H, W, C = c5.shape
    HW = H * W
    N = head_weight.shape[0]

    # Channels-last -> [B, HW, C] is a free reshape (lane axis unchanged).
    feat = c5.reshape(B, HW, C)

    # Fold the 1/(H*W) mean scale into the tiny head weight; pad N to a lane-dense
    # multiple of 128 so the output store is unmasked.
    N_pad = ((N + 127) // 128) * 128
    w_t = (head_weight.T.astype(jnp.float32)) * (1.0 / HW)          # [C, N]
    w_t = jnp.pad(w_t, ((0, 0), (0, N_pad - N)))                    # [C, N_pad]
    b = jnp.pad(head_bias.astype(jnp.float32), (0, N_pad - N)).reshape(1, N_pad)

    TB = max(1, min(block_b, B))
    grid = (pl.cdiv(B, TB),)

    out = pl.pallas_call(
        _detector_head_kernel,
        out_shape=jax.ShapeDtypeStruct((B, N_pad), jnp.float32),
        grid_spec=pltpu.PrefetchScalarGridSpec(
            num_scalar_prefetch=0,
            grid=grid,
            in_specs=[
                # Batch-tiled features pipeline the DMA; weight/bias stay resident.
                pl.BlockSpec((TB, HW, C), lambda i: (i, 0, 0)),
                pl.BlockSpec((C, N_pad), lambda i: (0, 0)),
                pl.BlockSpec((1, N_pad), lambda i: (0, 0)),
            ],
            out_specs=pl.BlockSpec((TB, N_pad), lambda i: (i, 0)),
        ),
        compiler_params=pltpu.CompilerParams(
            dimension_semantics=("parallel",),  # independent batch tiles -> both TCs on v7x
        ),
    )(feat, w_t, b)

    return out[:, :N]


def init_head_params(key, in_features, num_classes, std=2e-5):
    """Deterministic stand-in for make_conv_or_linear(Linear(...),
    init_weight=trunc_normal_(std=2e-5), init_bias=zeros_)."""
    w_key, _ = jax.random.split(key)
    weight = std * jax.random.truncated_normal(
        w_key, -2.0, 2.0, (num_classes, in_features), dtype=jnp.float32
    )
    bias = jnp.zeros((num_classes,), dtype=jnp.float32)
    return weight, bias


if __name__ == "__main__":
    key = jax.random.PRNGKey(0)
    k_feat, k_head = jax.random.split(key)

    # Small synthetic shapes:
    #   batch=2, backbone_out_channels=32 (stand-in for resnet50's 2048),
    #   C5 spatial = 4x4 (i.e. a 64x64 input at out_stride=16), num_classes=8.
    B, C, H, W = 2, 32, 4, 4
    NUM_CLASSES = 8

    # Channels-last C5 features (natural TPU layout -> no wrapper transpose).
    c5_nhwc = jax.random.normal(k_feat, (B, H, W, C), dtype=jnp.float32)
    head_w, head_b = init_head_params(k_head, C, NUM_CLASSES)

    # Pure-JAX reference of the PyTorch forward (spatial mean pooling + linear head).
    ref = c5_nhwc.mean(axis=(1, 2)) @ head_w.T + head_b

    # f32 channels-last path (hot path).
    logits = resnet_detector_forward(c5_nhwc, head_w, head_b)
    logits = jax.block_until_ready(logits)
    assert logits.shape == (B, NUM_CLASSES)
    assert jnp.allclose(logits, ref, atol=1e-5, rtol=1e-5), "mismatch vs reference (f32)"

    # NCHW convenience path matches the PyTorch layout exactly.
    c5_nchw = jnp.transpose(c5_nhwc, (0, 3, 1, 2))
    logits_nchw = jax.block_until_ready(
        resnet_detector_forward(c5_nchw, head_w, head_b, data_format="NCHW")
    )
    assert jnp.allclose(logits_nchw, ref, atol=1e-5, rtol=1e-5), "mismatch vs reference (NCHW)"

    # bf16 features: HBM read halved, pooling accumulated in f32 inside the kernel.
    c5_bf16 = c5_nhwc.astype(jnp.bfloat16)
    ref_bf16 = c5_bf16.astype(jnp.float32).mean(axis=(1, 2)) @ head_w.T + head_b
    logits_bf16 = jax.block_until_ready(
        resnet_detector_forward(c5_bf16, head_w, head_b)
    )
    assert jnp.allclose(logits_bf16, ref_bf16, atol=1e-6, rtol=1e-4), "mismatch vs reference (bf16)"

    print("KERNEL_OK")
</pallas_src>

<mosaic_0001>
module attributes {stable_mosaic.version = 11 : i64} {
  func.func @_detector_head_kernel(%arg0: i32, %arg1: memref<2x16x32xf32, #tpu.memory_space<vmem>>, %arg2: memref<32x128xf32, #tpu.memory_space<vmem>>, %arg3: memref<1x128xf32, #tpu.memory_space<vmem>>, %arg4: memref<2x128xf32, #tpu.memory_space<vmem>>) attributes {dimension_semantics = [#tpu.dimension_semantics<parallel>], iteration_bounds = array<i64: 1>, scalar_prefetch = 0 : i64, scratch_operands = 0 : i64, tpu.core_type = #tpu.core_type<tc>, window_params = [{transform_indices = @transform_0, window_bounds = array<i64: 2, 16, 32>}, {pipeline_mode = #tpu.pipeline_mode<synchronous>, transform_indices = @transform_1, window_bounds = array<i64: 32, 128>}, {pipeline_mode = #tpu.pipeline_mode<synchronous>, transform_indices = @transform_2, window_bounds = array<i64: 1, 128>}, {transform_indices = @transform_3, window_bounds = array<i64: 2, 128>}]} {
    %c0 = arith.constant 0 : index
    %c0_0 = arith.constant 0 : index
    %c0_1 = arith.constant 0 : index
    %0 = vector.load %arg1[%c0, %c0_0, %c0_1] : memref<2x16x32xf32, #tpu.memory_space<vmem>>, vector<2x16x32xf32>
    %cst = arith.constant dense<0.000000e+00> : vector<2x32xf32>
    %1 = vector.multi_reduction <add>, %0, %cst [1] : vector<2x16x32xf32> to vector<2x32xf32>
    %c0_2 = arith.constant 0 : index
    %c0_3 = arith.constant 0 : index
    %2 = vector.load %arg2[%c0_2, %c0_3] : memref<32x128xf32, #tpu.memory_space<vmem>>, vector<32x128xf32>
    %cst_4 = arith.constant dense<0.000000e+00> : vector<2x128xf32>
    %3 = tpu.matmul %1, %2, %cst_4 {dimension_numbers = #tpu.dot_dimension_numbers<[1], [0], [0], [1], [0, 0, 1, 1], [], []>} : vector<2x32xf32>, vector<32x128xf32>, vector<2x128xf32> -> vector<2x128xf32>
    %c0_5 = arith.constant 0 : index
    %c0_6 = arith.constant 0 : index
    %4 = vector.load %arg3[%c0_5, %c0_6] : memref<1x128xf32, #tpu.memory_space<vmem>>, vector<1x128xf32>
    %5 = vector.broadcast %4 : vector<1x128xf32> to vector<2x128xf32>
    %6 = arith.addf %3, %5 : vector<2x128xf32>
    %c0_7 = arith.constant 0 : index
    %c0_8 = arith.constant 0 : index
    %7 = vector.load %arg4[%c0_7, %c0_8] : memref<2x128xf32, #tpu.memory_space<vmem>>, vector<2x128xf32>
    tpu.vector_store %arg4[%c0_7, %c0_8], %6 {strides = array<i32>} : memref<2x128xf32, #tpu.memory_space<vmem>>, vector<2x128xf32>,
    return
  }
  func.func @transform_0(%arg0: i32) -> (i32, i32, i32) {
    %c0_i32 = arith.constant 0 : i32
    %c0_i32_0 = arith.constant 0 : i32
    %c0_i32_1 = arith.constant 0 : i32
    return %arg0, %c0_i32, %c0_i32_0 : i32, i32, i32
  }
  func.func @transform_1(%arg0: i32) -> (i32, i32) {
    %c0_i32 = arith.constant 0 : i32
    %c0_i32_0 = arith.constant 0 : i32
    %c0_i32_1 = arith.constant 0 : i32
    return %c0_i32, %c0_i32_0 : i32, i32
  }
  func.func @transform_2(%arg0: i32) -> (i32, i32) {
    %c0_i32 = arith.constant 0 : i32
    %c0_i32_0 = arith.constant 0 : i32
    %c0_i32_1 = arith.constant 0 : i32
    return %c0_i32, %c0_i32_0 : i32, i32
  }
  func.func @transform_3(%arg0: i32) -> (i32, i32) {
    %c0_i32 = arith.constant 0 : i32
    %c0_i32_0 = arith.constant 0 : i32
    return %arg0, %c0_i32 : i32, i32
  }
}

</mosaic_0001>

<llo_original>
// kernel: tpu_custom_call.1
$region0: #{tpu_custom_call.1}
  #allocation0 [shape = 'u32[]', space=smem, size = 0x4, offset = 0x4, fixed_abs, tag = 'smem constant byte address 0x4 - core index']
  #allocation1 [shape = 'u32[144,128]{1,0:T(1,128)}', space=vmem, size = 0x12000, scoped, tag = 'internal scratch']
  %s0 = inlined_call_operand.hbm [shape: f32[2,16,32], index: 0, kind: input, shape index: {}]
  %s1 = inlined_call_operand.hbm [shape: f32[32,128], index: 1, kind: input, shape index: {}]
  %s2 = inlined_call_operand.vmem [shape: f32[1,128], index: 2, kind: input, shape index: {}]
  %s3 = inlined_call_operand.hbm [shape: f32[2,128], index: 3, kind: output, shape index: {}]
  %s4 = sld [smem:[#allocation0]]
  $region30: #{tpu_custom_call.1} parent=0
    _
  %s6 = ssub.s32 1, %s4
  %s7 = scalar_select 0, %s6, %s4
  $region1: #{tpu_custom_call.1} parent=0
    #allocation2 [shape = 'u8[16384]{0}', space=vmem, size = 0x4000, scoped, tag = 'input window, operand 0, single buffered']
    #allocation3 [shape = 's32[1]{0}', space=sflag, size = 0x4, scoped, tag = 'scoped memory for tpu_custom_call.1']
    #allocation4 [shape = 's32[1]{0}', space=sflag, size = 0x4, scoped, tag = 'scoped memory for tpu_custom_call.1']
    #allocation5 [shape = 'u8[16384]{0}', space=vmem, size = 0x4000, scoped, tag = 'input window, operand 1, single buffered']
    #allocation6 [shape = 's32[1]{0}', space=sflag, size = 0x4, scoped, tag = 'scoped memory for tpu_custom_call.1']
    #allocation7 [shape = 'u8[1024]{0}', space=vmem, size = 0x400, scoped, tag = 'output window, operand 0, single buffered']
    %8 = vsyncpa [#allocation3], 0
    %9 = vsyncpa [#allocation6], 0
    %10 = vsyncpa [#allocation4], 0
    // Predicated region
    $region2: #{tpu_custom_call.1} parent=1 // pred_check
      _
    $region3: #{tpu_custom_call.1} parent=1 // pred_check_branch
      %12 = sbr.rel (0) target = $region5
    $region4: #{tpu_custom_call.1} parent=1 // pred_region
      %s14 = ssub.s32 512, 512
      %15 = vsyncadd [#allocation3], %s14
      %s16 = sshll.u32 [#allocation2], 4
      %s17 = int_to_ptr.vmem [resolvable:$true] %s16
      %22 = dma.hbm_to_vmem [thread:$0]  %s0, 512, %s17, [#allocation3], 128, 128, 8
    $region5: #{tpu_custom_call.1} parent=1 // pred_fallthru
      _
    // Predicated region
    $region6: #{tpu_custom_call.1} parent=1 // pred_check
      _
    $region7: #{tpu_custom_call.1} parent=1 // pred_check_branch
      %24 = sbr.rel (0) target = $region9
    $region8: #{tpu_custom_call.1} parent=1 // pred_region
      %s26 = ssub.s32 512, 512
      %27 = vsyncadd [#allocation6], %s26
      %s28 = sshll.u32 [#allocation5], 4
      %s29 = int_to_ptr.vmem [resolvable:$true] %s28
      %34 = dma.hbm_to_vmem [thread:$0]  %s1, 512, %s29, [#allocation6], 128, 128, 8
    $region9: #{tpu_custom_call.1} parent=1 // pred_fallthru
      _
    // Predicated region
    $region10: #{tpu_custom_call.1} parent=1 // pred_check
      _
    $region11: #{tpu_custom_call.1} parent=1 // pred_check_branch
      %36 = sbr.rel (0) target = $region13
    $region12: #{tpu_custom_call.1} parent=1 // pred_region
      _
    $region13: #{tpu_custom_call.1} parent=1 // pred_fallthru
      _
    // Predicated region
    $region14: #{tpu_custom_call.1} parent=1 // pred_check
      _
    $region15: #{tpu_custom_call.1} parent=1 // pred_check_branch
      %38 = sbr.rel (0) target = $region17
    $region16: #{tpu_custom_call.1} parent=1 // pred_region
      %39 = dma.done [#allocation3], 512
    $region17: #{tpu_custom_call.1} parent=1 // pred_fallthru
      _
    // Predicated region
    $region18: #{tpu_custom_call.1} parent=1 // pred_check
      _
    $region19: #{tpu_custom_call.1} parent=1 // pred_check_branch
      %41 = sbr.rel (0) target = $region21
    $region20: #{tpu_custom_call.1} parent=1 // pred_region
      %42 = dma.done [#allocation6], 512
    $region21: #{tpu_custom_call.1} parent=1 // pred_fallthru
      _
    %v43 = vld [vmem:[#allocation2] sm:$0xff]
    %v44 = vld [vmem:[#allocation2 + $0x8] sm:$0xff]
    %v45 = vld [vmem:[#allocation2 + $0x10] sm:$0xff]
    %v46 = vld [vmem:[#allocation2 + $0x18] sm:$0xff]
    %vm47 = vcmask 261120
    %v48 = vsel %vm47, %v43, 0.0
    %v49 = vsel %vm47, %v44, 0.0
    %v50 = vadd.f32 %v48, %v49
    %v51 = vrot.slane %v50, 4
    %v52 = vadd.f32 %v50, %v51
    %v53 = vrot.slane %v52, 2
    %v54 = vadd.f32 %v52, %v53
    %v55 = vrot.slane %v54, 1
    %v56 = vadd.f32 %v54, %v55
    %v57 = vsel %vm47, %v45, 0.0
    %v58 = vsel %vm47, %v46, 0.0
    %v59 = vadd.f32 %v57, %v58
    %v60 = vrot.slane %v59, 4
    %v61 = vadd.f32 %v59, %v60
    %v62 = vrot.slane %v61, 2
    %v63 = vadd.f32 %v61, %v62
    %v64 = vrot.slane %v63, 1
    %v65 = vadd.f32 %v63, %v64
    %v66 = vld [vmem:[#allocation5] sm:$0xff]
    %v67 = vld [vmem:[#allocation5 + $0x8] sm:$0xff]
    %v68 = vld [vmem:[#allocation5 + $0x10] sm:$0xff]
    %v69 = vld [vmem:[#allocation5 + $0x18] sm:$0xff]
    %v70 = vld [vmem:[%s2] sm:$0x1]
    %v72 = vlaneseq
    %v73 = vshrl.u32 %v72, 7
    %v74 = vsub.s32 0, %v73
    %v75 = vrot.slane %v70, %v74
    %vm79 = vcmask 1041409
    %v80 = vsel %vm79, %v65, %v56
    %v81 = vsel %vm47, %v80, 0
    %83 = vmatprep.subr.mxu0 0.0
    %84 = vmatpush1.msra.mxu0 %v66
    %85 = vmatprep.subr.mxu0 0.0
    %86 = vmatpush1.msra.mxu0 %v67
    %87 = vmatprep.subr.mxu0 0.0
    %88 = vmatpush1.msra.mxu0 %v68
    %89 = vmatprep.subr.mxu0 0.0
    %90 = vmatpush1.msra.mxu0 %v69
    %91 = vmatprep.subr.mxu0 0.0
    %92 = vmatpush1.msra.mxu0 0.0
    %93 = vmatprep.subr.mxu0 0.0
    %94 = vmatpush1.msra.mxu0 0.0
    %95 = vmatprep.subr.mxu0 0.0
    %96 = vmatpush1.msra.mxu0 0.0
    %97 = vmatprep.subr.mxu0 0.0
    %98 = vmatpush1.msra.mxu0 0.0
    %99 = vmatprep.subr.mxu0 0.0
    %100 = vmatpush1.msra.mxu0 0.0
    %101 = vmatprep.subr.mxu0 0.0
    %102 = vmatpush1.msra.mxu0 0.0
    %103 = vmatprep.subr.mxu0 0.0
    %104 = vmatpush1.msra.mxu0 0.0
    %105 = vmatprep.subr.mxu0 0.0
    %106 = vmatpush1.msra.mxu0 0.0
    %107 = vmatprep.subr.mxu0 0.0
    %108 = vmatpush1.msra.mxu0 0.0
    %109 = vmatprep.subr.mxu0 0.0
    %110 = vmatpush1.msra.mxu0 0.0
    %111 = vmatprep.subr.mxu0 0.0
    %112 = vmatpush1.msra.mxu0 0.0
    %113 = vmatprep.subr.mxu0 0.0
    %114 = vmatpush1.msra.mxu0 0.0
    %115 = vmatprep.subr.mxu0 0.0
    %116 = vmatpush1.msra.mxu0 0.0
    %117 = vmatprep.subr.mxu0 0.0
    %118 = vmatpush1.msra.mxu0 0.0
    %119 = vmatprep.subr.mxu0 0.0
    %120 = vmatpush1.msra.mxu0 0.0
    %121 = vmatprep.subr.mxu0 0.0
    %122 = vmatpush1.msra.mxu0 0.0
    %123 = vmatprep.subr.mxu0 0.0
    %124 = vmatpush1.msra.mxu0 0.0
    %125 = vmatprep.subr.mxu0 0.0
    %126 = vmatpush1.msra.mxu0 0.0
    %127 = vmatprep.subr.mxu0 0.0
    %128 = vmatpush1.msra.mxu0 0.0
    %129 = vmatprep.subr.mxu0 0.0
    %130 = vmatpush1.msra.mxu0 0.0
    %131 = vmatprep.subr.mxu0 0.0
    %132 = vmatpush1.msra.mxu0 0.0
    %133 = vmatprep.subr.mxu0 0.0
    %134 = vmatpush1.msra.mxu0 0.0
    %135 = vmatprep.subr.mxu0 0.0
    %136 = vmatpush1.msra.mxu0 0.0
    %137 = vmatprep.subr.mxu0 0.0
    %138 = vmatpush1.msra.mxu0 0.0
    %139 = vmatprep.subr.mxu0 0.0
    %140 = vmatpush1.msra.mxu0 0.0
    %141 = vmatprep.subr.mxu0 0.0
    %142 = vmatpush1.msra.mxu0 0.0
    %143 = vmatprep.subr.mxu0 0.0
    %144 = vmatpush1.msra.mxu0 0.0
    %145 = vmatprep.subr.mxu0 0.0
    %146 = vmatpush1.msra.mxu0 0.0
    %147 = vmatprep.mubr.f32.mxu0 0.0
    %148 = vmatmul.mubr.f32.gmra.mrb[0].mxu0 %v81
    %v149 = vpop.f32.mrb[0].mxu0
    %v150 = vadd.f32 %v75, %v149
    %v151 = vpop.f32.mrb[0].mxu0
    %152 = vdwg.mxu0
    %153 = vst [vmem:[#allocation7] sm:$0x3] %v150
    // Predicated region
    $region22: #{tpu_custom_call.1} parent=1 // pred_check
      _
    $region23: #{tpu_custom_call.1} parent=1 // pred_check_branch
      %155 = sbr.rel (0) target = $region25
    $region24: #{tpu_custom_call.1} parent=1 // pred_region
      %s157 = ssub.s32 32, 32
      %158 = vsyncadd [#allocation4], %s157
      %s160 = sshll.u32 [#allocation7], 4
      %s161 = int_to_ptr.vmem [resolvable:$true] %s160
      %163 = dma.vmem_to_hbm [thread:$0]  %s161, 32, %s3, [#allocation4]
    $region25: #{tpu_custom_call.1} parent=1 // pred_fallthru
      _
    // Predicated region
    $region26: #{tpu_custom_call.1} parent=1 // pred_check
      _
    $region27: #{tpu_custom_call.1} parent=1 // pred_check_branch
      %165 = sbr.rel (0) target = $region29
    $region28: #{tpu_custom_call.1} parent=1 // pred_region
      %166 = dma.done [#allocation4], 32
    $region29: #{tpu_custom_call.1} parent=1 // pred_fallthru
      _
    %167 = vsyncpa [#allocation3], 1
    %168 = vsyncpa [#allocation6], 1
    %169 = vsyncpa [#allocation4], 1

</llo_original>
